<compile_context>
chip_gen: v7x
topology: tpu7x:2x2x1
jax: 0.10.0
libtpu: 0.0.40
codegen_flags: <defaults>
</compile_context>

<pallas_src>
import functools

import jax
import jax.numpy as jnp
from jax.experimental import pallas as pl
from jax.experimental.pallas import tpu as pltpu


# ----------------------------------------------------------------------------
# Helpers
# ----------------------------------------------------------------------------
def _round_up(n, m):
    return ((n + m - 1) // m) * m


def _lane_pad(n):
    """VMEM width occupied by a minor dim of size n (padded to 128 lanes)."""
    return _round_up(n, 128)


_VMEM_BLOCK_BUDGET = 24 * 1024 * 1024   # headroom under the 32 MiB default scope


def _per_row_block_bytes(input_dim, hidden_dim, act_itemsize):
    """VMEM bytes per batch row for the tiled blocks (x, h, c in + h, c out)."""
    return ((_lane_pad(input_dim) + 2 * _lane_pad(hidden_dim)) * act_itemsize
            + 2 * _lane_pad(hidden_dim) * 4)


def _choose_batch_tile(B, input_dim, hidden_dim, act_itemsize):
    """8-aligned batch tile: large enough to amortize the ~0.35us grid-step
    overhead, >=2 grid steps for B>=16 (v7x 2-TC split), VMEM-capped."""
    b8 = _round_up(B, 8)
    tb = min(b8, 512)                               # 512-row tiles ~85% of HBM roofline
    if b8 >= 16:                                    # v7x: keep both TensorCores busy
        tb = min(tb, _round_up(pl.cdiv(b8, 2), 8))
    per_row = _per_row_block_bytes(input_dim, hidden_dim, act_itemsize)
    cap = max(8, (_VMEM_BLOCK_BUDGET // (2 * per_row)) // 8 * 8)   # 2x double-buffer
    return max(8, min(tb, cap))


def _vmem_needed_bytes(tb, input_dim, hidden_dim, act_itemsize, w_itemsize):
    h4 = _lane_pad(4 * hidden_dim)
    per_row = _per_row_block_bytes(input_dim, hidden_dim, act_itemsize)
    weights = ((_round_up(input_dim, 8) + _round_up(hidden_dim, 8)) * h4 * w_itemsize
               + 8 * h4 * 4)
    return 2 * (tb * per_row + weights)             # everything double-buffered


# ----------------------------------------------------------------------------
# Kernel
# ----------------------------------------------------------------------------
def _lstm_cell_kernel(x_ref, hprev_ref, cprev_ref,
                      wx_ref, wh_ref, b_ref,
                      h_out_ref, c_out_ref, *, matmul_dtype):
    H = cprev_ref.shape[-1]

    # bf16 (or f32) MXU operands, f32 accumulation.  Gate slab is (tb, 4H)
    # which is lane-dense (4H = 128 at H = 32).
    xm = x_ref[...].astype(matmul_dtype)
    hm = hprev_ref[...].astype(matmul_dtype)
    gates = jnp.dot(xm, wx_ref[...], preferred_element_type=jnp.float32)
    gates = gates + jnp.dot(hm, wh_ref[...], preferred_element_type=jnp.float32)
    gates = gates + b_ref[...].astype(jnp.float32)

    # Column layout is [f | i | o | c]; one sigmoid over the 3H-wide slab.
    # All elementwise/transcendental math stays f32 (no bf16 VALU/EUP on v5e).
    sig = jax.nn.sigmoid(gates[:, : 3 * H])
    f_t = sig[:, 0:H]
    i_sig = sig[:, H:2 * H]
    o_t = sig[:, 2 * H:3 * H]
    c_gate = jnp.tanh(gates[:, 3 * H:])

    c_t = f_t * cprev_ref[...].astype(jnp.float32) + i_sig * c_gate
    # NOTE: the reference module uses addition here (o_t + tanh(c_t)),
    # reproduced exactly (a standard LSTM would multiply).
    h_t = o_t + jnp.tanh(c_t)

    h_out_ref[...] = h_t.astype(h_out_ref.dtype)
    c_out_ref[...] = c_t.astype(c_out_ref.dtype)


# ----------------------------------------------------------------------------
# Wrapper
# ----------------------------------------------------------------------------
def lstm_cell_pallas(x, h_prev, c_prev, packed_params, *,
                     matmul_dtype=jnp.bfloat16, block_b=None):
    """Fused LSTM cell forward.

    packed_params = (Wx, Wh, b) with shapes
        Wx : (input_dim, 4*hidden_dim)   (matmul dtype, e.g. bf16)
        Wh : (hidden_dim, 4*hidden_dim)  (matmul dtype, e.g. bf16)
        b  : (1, 4*hidden_dim)           (f32)
    Gate column order in the packed 4H axis is [forget | input | output | cell].
    """
    wx, wh, b = packed_params
    B, input_dim = x.shape
    H = h_prev.shape[1]
    H4 = 4 * H
    assert wx.shape == (input_dim, H4)
    assert wh.shape == (H, H4)
    assert b.shape == (1, H4)
    assert h_prev.shape == (B, H) and c_prev.shape == (B, H)

    act_itemsize = jnp.dtype(x.dtype).itemsize
    w_itemsize = jnp.dtype(wx.dtype).itemsize

    if block_b is None:
        tb = _choose_batch_tile(B, input_dim, H, act_itemsize)
    else:
        assert block_b % 8 == 0, "block_b must be a multiple of 8"
        tb = block_b

    grid_b = pl.cdiv(B, tb)
    B_pad = grid_b * tb
    if B_pad != B:                      # pad awkward batch sizes; sliced back below
        pad = B_pad - B
        x = jnp.pad(x, ((0, pad), (0, 0)))
        h_prev = jnp.pad(h_prev, ((0, pad), (0, 0)))
        c_prev = jnp.pad(c_prev, ((0, pad), (0, 0)))

    vmem = pltpu.MemorySpace.VMEM
    needed = _vmem_needed_bytes(tb, input_dim, H, act_itemsize, w_itemsize)
    vmem_limit = int(min(48 << 20, max(32 << 20, needed + (8 << 20))))

    cost = pl.CostEstimate(
        flops=2 * B_pad * (input_dim + H) * H4,
        transcendentals=5 * B_pad * H,          # 3 sigmoid + 2 tanh per hidden unit
        bytes_accessed=int(
            x.size * act_itemsize + h_prev.size * act_itemsize
            + c_prev.size * act_itemsize
            + wx.size * w_itemsize + wh.size * w_itemsize
            + b.size * jnp.dtype(b.dtype).itemsize
            + 2 * B_pad * H * 4),
    )

    kernel = functools.partial(_lstm_cell_kernel, matmul_dtype=matmul_dtype)

    h_t, c_t = pl.pallas_call(
        kernel,
        out_shape=(jax.ShapeDtypeStruct((B_pad, H), jnp.float32),
                   jax.ShapeDtypeStruct((B_pad, H), jnp.float32)),
        grid=(grid_b,),
        in_specs=[
            pl.BlockSpec((tb, input_dim), lambda i: (i, 0), memory_space=vmem),
            pl.BlockSpec((tb, H),         lambda i: (i, 0), memory_space=vmem),
            pl.BlockSpec((tb, H),         lambda i: (i, 0), memory_space=vmem),
            pl.BlockSpec((input_dim, H4), lambda i: (0, 0), memory_space=vmem),
            pl.BlockSpec((H, H4),         lambda i: (0, 0), memory_space=vmem),
            pl.BlockSpec((1, H4),         lambda i: (0, 0), memory_space=vmem),
        ],
        out_specs=(
            pl.BlockSpec((tb, H), lambda i: (i, 0), memory_space=vmem),
            pl.BlockSpec((tb, H), lambda i: (i, 0), memory_space=vmem),
        ),
        compiler_params=pltpu.CompilerParams(
            dimension_semantics=("parallel",),
            vmem_limit_bytes=vmem_limit,
        ),
        cost_estimate=cost,
    )(x, h_prev, c_prev, wx, wh, b)

    if B_pad != B:
        h_t = h_t[:B]
        c_t = c_t[:B]
    return h_t, c_t


# ----------------------------------------------------------------------------
# Parameter init + packing (mimics nn.Linear init: U(-k, k), k = 1/sqrt(fan_in))
# ----------------------------------------------------------------------------
def init_params(key, input_dim, hidden_dim):
    """Per-gate params, each stored as W:(input_dim+hidden_dim, H), b:(1, H)."""
    D = input_dim + hidden_dim
    k = 1.0 / jnp.sqrt(jnp.float32(D))
    params = {}
    for name in ["forget", "input", "cell", "output"]:
        key, kw, kb = jax.random.split(key, 3)
        w = jax.random.uniform(kw, (D, hidden_dim), jnp.float32, -k, k)
        b = jax.random.uniform(kb, (1, hidden_dim), jnp.float32, -k, k)
        params[name] = (w, b)
    return params


def pack_params(params, input_dim, *, matmul_dtype=jnp.bfloat16):
    """Pack per-gate (W, b) into fused (Wx, Wh, b) with column order [f|i|o|c].

    Weights are stored in `matmul_dtype` (bf16 by default: half HBM bytes,
    full-rate MXU); the bias stays f32 since it is added after accumulation.
    """
    order = ["forget", "input", "output", "cell"]
    wx = jnp.concatenate([params[n][0][:input_dim, :] for n in order],
                         axis=1).astype(matmul_dtype)
    wh = jnp.concatenate([params[n][0][input_dim:, :] for n in order],
                         axis=1).astype(matmul_dtype)
    b = jnp.concatenate([params[n][1] for n in order], axis=1).astype(jnp.float32)
    return wx, wh, b


# ----------------------------------------------------------------------------
# Pure-JAX reference (semantics identical to the PyTorch module)
# ----------------------------------------------------------------------------
def lstm_cell_ref(x, h_prev, c_prev, params):
    comb = jnp.concatenate([x, h_prev], axis=1)

    def lin(p):
        w, b = p
        return comb @ w + b

    f_t = jax.nn.sigmoid(lin(params["forget"]))
    i_t = jax.nn.sigmoid(lin(params["input"])) * jnp.tanh(lin(params["cell"]))
    o_t = jax.nn.sigmoid(lin(params["output"]))
    c_t = f_t * c_prev + i_t
    h_t = o_t + jnp.tanh(c_t)
    return h_t, c_t


# ----------------------------------------------------------------------------
if __name__ == "__main__":
    batch = 8
    input_dim = 16
    hidden_dim = 32          # 4H = 128 -> lane-dense fused gate slab

    key = jax.random.PRNGKey(0)
    key, kx, kh, kc, kp = jax.random.split(key, 5)
    x = jax.random.normal(kx, (batch, input_dim), jnp.float32)
    h_prev = jax.random.normal(kh, (batch, hidden_dim), jnp.float32)
    c_prev = jax.random.normal(kc, (batch, hidden_dim), jnp.float32)

    params = init_params(kp, input_dim, hidden_dim)
    h_ref, c_ref = lstm_cell_ref(x, h_prev, c_prev, params)

    # 1) Exact-f32 mode: must match the pure-JAX reference to f32 precision.
    packed_f32 = pack_params(params, input_dim, matmul_dtype=jnp.float32)
    run_f32 = jax.jit(functools.partial(lstm_cell_pallas, matmul_dtype=jnp.float32))
    h32, c32 = run_f32(x, h_prev, c_prev, packed_f32)
    jax.block_until_ready((h32, c32))
    assert jnp.allclose(h32, h_ref, atol=1e-4, rtol=1e-4), "h_t mismatch (f32 mode)"
    assert jnp.allclose(c32, c_ref, atol=1e-4, rtol=1e-4), "c_t mismatch (f32 mode)"

    # 2) Perf mode: bf16 matmul operands, f32 accumulation + f32 elementwise.
    packed_bf16 = pack_params(params, input_dim, matmul_dtype=jnp.bfloat16)
    run_bf16 = jax.jit(functools.partial(lstm_cell_pallas, matmul_dtype=jnp.bfloat16))
    h16, c16 = run_bf16(x, h_prev, c_prev, packed_bf16)
    jax.block_until_ready((h16, c16))
    assert jnp.allclose(h16, h_ref, atol=3e-2, rtol=3e-2), "h_t mismatch (bf16 mode)"
    assert jnp.allclose(c16, c_ref, atol=3e-2, rtol=3e-2), "c_t mismatch (bf16 mode)"

    print("KERNEL_OK")
</pallas_src>

<mosaic_0001>
module attributes {stable_mosaic.version = 11 : i64} {
  func.func @_lstm_cell_kernel(%arg0: i32, %arg1: memref<8x16xf32, #tpu.memory_space<vmem>>, %arg2: memref<8x32xf32, #tpu.memory_space<vmem>>, %arg3: memref<8x32xf32, #tpu.memory_space<vmem>>, %arg4: memref<16x128xf32, #tpu.memory_space<vmem>>, %arg5: memref<32x128xf32, #tpu.memory_space<vmem>>, %arg6: memref<1x128xf32, #tpu.memory_space<vmem>>, %arg7: memref<8x32xf32, #tpu.memory_space<vmem>>, %arg8: memref<8x32xf32, #tpu.memory_space<vmem>>) attributes {dimension_semantics = [#tpu.dimension_semantics<parallel>], iteration_bounds = array<i64: 1>, scalar_prefetch = 0 : i64, scratch_operands = 0 : i64, tpu.core_type = #tpu.core_type<tc>, window_params = [{transform_indices = @transform_0, window_bounds = array<i64: 8, 16>}, {transform_indices = @transform_1, window_bounds = array<i64: 8, 32>}, {transform_indices = @transform_2, window_bounds = array<i64: 8, 32>}, {pipeline_mode = #tpu.pipeline_mode<synchronous>, transform_indices = @transform_3, window_bounds = array<i64: 16, 128>}, {pipeline_mode = #tpu.pipeline_mode<synchronous>, transform_indices = @transform_4, window_bounds = array<i64: 32, 128>}, {pipeline_mode = #tpu.pipeline_mode<synchronous>, transform_indices = @transform_5, window_bounds = array<i64: 1, 128>}, {transform_indices = @transform_6, window_bounds = array<i64: 8, 32>}, {transform_indices = @transform_7, window_bounds = array<i64: 8, 32>}]} {
    %c0 = arith.constant 0 : index
    %c0_0 = arith.constant 0 : index
    %0 = vector.load %arg1[%c0, %c0_0] : memref<8x16xf32, #tpu.memory_space<vmem>>, vector<8x16xf32>
    %c0_1 = arith.constant 0 : index
    %c0_2 = arith.constant 0 : index
    %1 = vector.load %arg2[%c0_1, %c0_2] : memref<8x32xf32, #tpu.memory_space<vmem>>, vector<8x32xf32>
    %c0_3 = arith.constant 0 : index
    %c0_4 = arith.constant 0 : index
    %2 = vector.load %arg4[%c0_3, %c0_4] : memref<16x128xf32, #tpu.memory_space<vmem>>, vector<16x128xf32>
    %cst = arith.constant dense<0.000000e+00> : vector<8x128xf32>
    %3 = tpu.matmul %0, %2, %cst {dimension_numbers = #tpu.dot_dimension_numbers<[1], [0], [0], [1], [0, 0, 1, 1], [], []>} : vector<8x16xf32>, vector<16x128xf32>, vector<8x128xf32> -> vector<8x128xf32>
    %c0_5 = arith.constant 0 : index
    %c0_6 = arith.constant 0 : index
    %4 = vector.load %arg5[%c0_5, %c0_6] : memref<32x128xf32, #tpu.memory_space<vmem>>, vector<32x128xf32>
    %cst_7 = arith.constant dense<0.000000e+00> : vector<8x128xf32>
    %5 = tpu.matmul %1, %4, %cst_7 {dimension_numbers = #tpu.dot_dimension_numbers<[1], [0], [0], [1], [0, 0, 1, 1], [], []>} : vector<8x32xf32>, vector<32x128xf32>, vector<8x128xf32> -> vector<8x128xf32>
    %6 = arith.addf %3, %5 : vector<8x128xf32>
    %c0_8 = arith.constant 0 : index
    %c0_9 = arith.constant 0 : index
    %7 = vector.load %arg6[%c0_8, %c0_9] : memref<1x128xf32, #tpu.memory_space<vmem>>, vector<1x128xf32>
    %8 = vector.broadcast %7 : vector<1x128xf32> to vector<8x128xf32>
    %9 = arith.addf %6, %8 : vector<8x128xf32>
    %10 = vector.extract_strided_slice %9 {offsets = [0, 0], sizes = [8, 96], strides = [1, 1]} : vector<8x128xf32> to vector<8x96xf32>
    %11 = arith.negf %10 : vector<8x96xf32>
    %12 = math.exp %11 : vector<8x96xf32>
    %cst_10 = arith.constant 1.000000e+00 : f32
    %13 = vector.broadcast %cst_10 : f32 to vector<8x96xf32>
    %14 = arith.addf %13, %12 : vector<8x96xf32>
    %15 = arith.divf %13, %14 : vector<8x96xf32>
    %16 = vector.extract_strided_slice %15 {offsets = [0, 0], sizes = [8, 32], strides = [1, 1]} : vector<8x96xf32> to vector<8x32xf32>
    %17 = vector.extract_strided_slice %15 {offsets = [0, 32], sizes = [8, 32], strides = [1, 1]} : vector<8x96xf32> to vector<8x32xf32>
    %18 = vector.extract_strided_slice %15 {offsets = [0, 64], sizes = [8, 32], strides = [1, 1]} : vector<8x96xf32> to vector<8x32xf32>
    %19 = vector.extract_strided_slice %9 {offsets = [0, 96], sizes = [8, 32], strides = [1, 1]} : vector<8x128xf32> to vector<8x32xf32>
    %20 = math.tanh %19 : vector<8x32xf32>
    %c0_11 = arith.constant 0 : index
    %c0_12 = arith.constant 0 : index
    %21 = vector.load %arg3[%c0_11, %c0_12] : memref<8x32xf32, #tpu.memory_space<vmem>>, vector<8x32xf32>
    %22 = arith.mulf %16, %21 : vector<8x32xf32>
    %23 = arith.mulf %17, %20 : vector<8x32xf32>
    %24 = arith.addf %22, %23 : vector<8x32xf32>
    %25 = math.tanh %24 : vector<8x32xf32>
    %26 = arith.addf %18, %25 : vector<8x32xf32>
    %c0_13 = arith.constant 0 : index
    %c0_14 = arith.constant 0 : index
    %27 = vector.load %arg7[%c0_13, %c0_14] : memref<8x32xf32, #tpu.memory_space<vmem>>, vector<8x32xf32>
    tpu.vector_store %arg7[%c0_13, %c0_14], %26 {strides = array<i32>} : memref<8x32xf32, #tpu.memory_space<vmem>>, vector<8x32xf32>,
    %c0_15 = arith.constant 0 : index
    %c0_16 = arith.constant 0 : index
    %28 = vector.load %arg8[%c0_15, %c0_16] : memref<8x32xf32, #tpu.memory_space<vmem>>, vector<8x32xf32>
    tpu.vector_store %arg8[%c0_15, %c0_16], %24 {strides = array<i32>} : memref<8x32xf32, #tpu.memory_space<vmem>>, vector<8x32xf32>,
    return
  }
  func.func @transform_0(%arg0: i32) -> (i32, i32) {
    %c0_i32 = arith.constant 0 : i32
    %c0_i32_0 = arith.constant 0 : i32
    return %arg0, %c0_i32 : i32, i32
  }
  func.func @transform_1(%arg0: i32) -> (i32, i32) {
    %c0_i32 = arith.constant 0 : i32
    %c0_i32_0 = arith.constant 0 : i32
    return %arg0, %c0_i32 : i32, i32
  }
  func.func @transform_2(%arg0: i32) -> (i32, i32) {
    %c0_i32 = arith.constant 0 : i32
    %c0_i32_0 = arith.constant 0 : i32
    return %arg0, %c0_i32 : i32, i32
  }
  func.func @transform_3(%arg0: i32) -> (i32, i32) {
    %c0_i32 = arith.constant 0 : i32
    %c0_i32_0 = arith.constant 0 : i32
    %c0_i32_1 = arith.constant 0 : i32
    return %c0_i32, %c0_i32_0 : i32, i32
  }
  func.func @transform_4(%arg0: i32) -> (i32, i32) {
    %c0_i32 = arith.constant 0 : i32
    %c0_i32_0 = arith.constant 0 : i32
    %c0_i32_1 = arith.constant 0 : i32
    return %c0_i32, %c0_i32_0 : i32, i32
  }
  func.func @transform_5(%arg0: i32) -> (i32, i32) {
    %c0_i32 = arith.constant 0 : i32
    %c0_i32_0 = arith.constant 0 : i32
    %c0_i32_1 = arith.constant 0 : i32
    return %c0_i32, %c0_i32_0 : i32, i32
  }
  func.func @transform_6(%arg0: i32) -> (i32, i32) {
    %c0_i32 = arith.constant 0 : i32
    %c0_i32_0 = arith.constant 0 : i32
    return %arg0, %c0_i32 : i32, i32
  }
  func.func @transform_7(%arg0: i32) -> (i32, i32) {
    %c0_i32 = arith.constant 0 : i32
    %c0_i32_0 = arith.constant 0 : i32
    return %arg0, %c0_i32 : i32, i32
  }
}

</mosaic_0001>

<llo_original>
// kernel: lstm_cell_pallas.1
$region0: #{lstm_cell_pallas.1}
  #allocation0 [shape = 'u32[]', space=smem, size = 0x4, offset = 0x4, fixed_abs, tag = 'smem constant byte address 0x4 - core index']
  #allocation1 [shape = 'u32[144,128]{1,0:T(1,128)}', space=vmem, size = 0x12000, scoped, tag = 'internal scratch']
  %s0 = inlined_call_operand.hbm [shape: f32[8,16], index: 0, kind: input, shape index: {}]
  %s1 = inlined_call_operand.hbm [shape: f32[8,32], index: 1, kind: input, shape index: {}]
  %s2 = inlined_call_operand.hbm [shape: f32[8,32], index: 2, kind: input, shape index: {}]
  %s3 = inlined_call_operand.hbm [shape: f32[16,128], index: 3, kind: input, shape index: {}]
  %s4 = inlined_call_operand.hbm [shape: f32[32,128], index: 4, kind: input, shape index: {}]
  %s5 = inlined_call_operand.vmem [shape: f32[1,128], index: 5, kind: input, shape index: {}]
  %s6 = inlined_call_operand.hbm [shape: f32[8,32], index: 6, kind: output, shape index: {0}]
  %s7 = inlined_call_operand.hbm [shape: f32[8,32], index: 7, kind: output, shape index: {1}]
  %8 = xla_tuple %s6, %s7
  %s9 = sld [smem:[#allocation0]]
  $region62: #{lstm_cell_pallas.1} parent=0
    _
  %s11 = ssub.s32 1, %s9
  %s12 = scalar_select 0, %s11, %s9
  $region1: #{lstm_cell_pallas.1} parent=0
    #allocation2 [shape = 'u8[4096]{0}', space=vmem, size = 0x1000, scoped, tag = 'input window, operand 0, single buffered']
    #allocation3 [shape = 's32[1]{0}', space=sflag, size = 0x4, scoped, tag = 'scoped memory for lstm_cell_pallas.1']
    #allocation4 [shape = 's32[1]{0}', space=sflag, size = 0x4, scoped, tag = 'scoped memory for lstm_cell_pallas.1']
    #allocation5 [shape = 'u8[4096]{0}', space=vmem, size = 0x1000, scoped, tag = 'input window, operand 1, single buffered']
    #allocation6 [shape = 's32[1]{0}', space=sflag, size = 0x4, scoped, tag = 'scoped memory for lstm_cell_pallas.1']
    #allocation7 [shape = 'u8[4096]{0}', space=vmem, size = 0x1000, scoped, tag = 'input window, operand 2, single buffered']
    #allocation8 [shape = 'u8[8192]{0}', space=vmem, size = 0x2000, scoped, tag = 'input window, operand 3, single buffered']
    #allocation9 [shape = 's32[1]{0}', space=sflag, size = 0x4, scoped, tag = 'scoped memory for lstm_cell_pallas.1']
    #allocation10 [shape = 'u8[16384]{0}', space=vmem, size = 0x4000, scoped, tag = 'input window, operand 4, single buffered']
    #allocation11 [shape = 'u8[4096]{0}', space=vmem, size = 0x1000, scoped, tag = 'output window, operand 0, single buffered']
    #allocation12 [shape = 'u8[4096]{0}', space=vmem, size = 0x1000, scoped, tag = 'output window, operand 1, single buffered']
    #allocation13 [shape = 's32[1]{0}', space=sflag, size = 0x4, scoped, tag = 'scoped memory for lstm_cell_pallas.1']
    %13 = vsyncpa [#allocation3], 0
    %14 = vsyncpa [#allocation6], 0
    %15 = vsyncpa [#allocation9], 0
    %16 = vsyncpa [#allocation4], 0
    %17 = vsyncpa [#allocation13], 0
    // Predicated region
    $region2: #{lstm_cell_pallas.1} parent=1 // pred_check
      _
    $region3: #{lstm_cell_pallas.1} parent=1 // pred_check_branch
      %19 = sbr.rel (0) target = $region5
    $region4: #{lstm_cell_pallas.1} parent=1 // pred_region
      %s21 = ssub.s32 128, 128
      %22 = vsyncadd [#allocation3], %s21
      %s24 = sshll.u32 [#allocation2], 4
      %s25 = int_to_ptr.vmem [resolvable:$true] %s24
      %27 = dma.hbm_to_vmem [thread:$0]  %s0, 128, %s25, [#allocation3]
    $region5: #{lstm_cell_pallas.1} parent=1 // pred_fallthru
      _
    // Predicated region
    $region6: #{lstm_cell_pallas.1} parent=1 // pred_check
      _
    $region7: #{lstm_cell_pallas.1} parent=1 // pred_check_branch
      %29 = sbr.rel (0) target = $region9
    $region8: #{lstm_cell_pallas.1} parent=1 // pred_region
      %s31 = ssub.s32 128, 128
      %32 = vsyncadd [#allocation6], %s31
      %s34 = sshll.u32 [#allocation5], 4
      %s35 = int_to_ptr.vmem [resolvable:$true] %s34
      %37 = dma.hbm_to_vmem [thread:$0]  %s1, 128, %s35, [#allocation6]
    $region9: #{lstm_cell_pallas.1} parent=1 // pred_fallthru
      _
    // Predicated region
    $region10: #{lstm_cell_pallas.1} parent=1 // pred_check
      _
    $region11: #{lstm_cell_pallas.1} parent=1 // pred_check_branch
      %39 = sbr.rel (0) target = $region13
    $region12: #{lstm_cell_pallas.1} parent=1 // pred_region
      %s41 = ssub.s32 128, 128
      %42 = vsyncadd [#allocation6], %s41
      %s44 = sshll.u32 [#allocation7], 4
      %s45 = int_to_ptr.vmem [resolvable:$true] %s44
      %47 = dma.hbm_to_vmem [thread:$0]  %s2, 128, %s45, [#allocation6]
    $region13: #{lstm_cell_pallas.1} parent=1 // pred_fallthru
      _
    // Predicated region
    $region14: #{lstm_cell_pallas.1} parent=1 // pred_check
      _
    $region15: #{lstm_cell_pallas.1} parent=1 // pred_check_branch
      %49 = sbr.rel (0) target = $region17
    $region16: #{lstm_cell_pallas.1} parent=1 // pred_region
      %s51 = ssub.s32 256, 256
      %52 = vsyncadd [#allocation9], %s51
      %s53 = sshll.u32 [#allocation8], 4
      %s54 = int_to_ptr.vmem [resolvable:$true] %s53
      %59 = dma.hbm_to_vmem [thread:$0]  %s3, 256, %s54, [#allocation9], 128, 128, 8
    $region17: #{lstm_cell_pallas.1} parent=1 // pred_fallthru
      _
    // Predicated region
    $region18: #{lstm_cell_pallas.1} parent=1 // pred_check
      _
    $region19: #{lstm_cell_pallas.1} parent=1 // pred_check_branch
      %61 = sbr.rel (0) target = $region21
    $region20: #{lstm_cell_pallas.1} parent=1 // pred_region
      %s63 = ssub.s32 512, 512
      %64 = vsyncadd [#allocation9], %s63
      %s65 = sshll.u32 [#allocation10], 4
      %s66 = int_to_ptr.vmem [resolvable:$true] %s65
      %71 = dma.hbm_to_vmem [thread:$0]  %s4, 512, %s66, [#allocation9], 128, 128, 8
    $region21: #{lstm_cell_pallas.1} parent=1 // pred_fallthru
      _
    // Predicated region
    $region22: #{lstm_cell_pallas.1} parent=1 // pred_check
      _
    $region23: #{lstm_cell_pallas.1} parent=1 // pred_check_branch
      %73 = sbr.rel (0) target = $region25
    $region24: #{lstm_cell_pallas.1} parent=1 // pred_region
      _
    $region25: #{lstm_cell_pallas.1} parent=1 // pred_fallthru
      _
    // Predicated region
    $region26: #{lstm_cell_pallas.1} parent=1 // pred_check
      _
    $region27: #{lstm_cell_pallas.1} parent=1 // pred_check_branch
      %75 = sbr.rel (0) target = $region29
    $region28: #{lstm_cell_pallas.1} parent=1 // pred_region
      %76 = dma.done [#allocation3], 128
    $region29: #{lstm_cell_pallas.1} parent=1 // pred_fallthru
      _
    // Predicated region
    $region30: #{lstm_cell_pallas.1} parent=1 // pred_check
      _
    $region31: #{lstm_cell_pallas.1} parent=1 // pred_check_branch
      %78 = sbr.rel (0) target = $region33
    $region32: #{lstm_cell_pallas.1} parent=1 // pred_region
      %79 = dma.done [#allocation6], 128
    $region33: #{lstm_cell_pallas.1} parent=1 // pred_fallthru
      _
    // Predicated region
    $region34: #{lstm_cell_pallas.1} parent=1 // pred_check
      _
    $region35: #{lstm_cell_pallas.1} parent=1 // pred_check_branch
      %81 = sbr.rel (0) target = $region37
    $region36: #{lstm_cell_pallas.1} parent=1 // pred_region
      %82 = dma.done [#allocation6], 128
    $region37: #{lstm_cell_pallas.1} parent=1 // pred_fallthru
      _
    // Predicated region
    $region38: #{lstm_cell_pallas.1} parent=1 // pred_check
      _
    $region39: #{lstm_cell_pallas.1} parent=1 // pred_check_branch
      %84 = sbr.rel (0) target = $region41
    $region40: #{lstm_cell_pallas.1} parent=1 // pred_region
      %85 = dma.done [#allocation9], 256
    $region41: #{lstm_cell_pallas.1} parent=1 // pred_fallthru
      _
    // Predicated region
    $region42: #{lstm_cell_pallas.1} parent=1 // pred_check
      _
    $region43: #{lstm_cell_pallas.1} parent=1 // pred_check_branch
      %87 = sbr.rel (0) target = $region45
    $region44: #{lstm_cell_pallas.1} parent=1 // pred_region
      %88 = dma.done [#allocation9], 512
    $region45: #{lstm_cell_pallas.1} parent=1 // pred_fallthru
      _
    %v89 = vld [vmem:[#allocation2] sm:$0xff]
    %v90 = vld [vmem:[#allocation5] sm:$0xff]
    %v91 = vld [vmem:[#allocation8] sm:$0xff]
    %v92 = vld [vmem:[#allocation8 + $0x8] sm:$0xff]
    %v93 = vld [vmem:[#allocation10] sm:$0xff]
    %v94 = vld [vmem:[#allocation10 + $0x8] sm:$0xff]
    %v95 = vld [vmem:[#allocation10 + $0x10] sm:$0xff]
    %v96 = vld [vmem:[#allocation10 + $0x18] sm:$0xff]
    %vm97 = vcmask 261120
    %v99 = vsel %vm97, %v90, 0
    %101 = vmatprep.subr.mxu0 0.0
    %102 = vmatpush1.msra.mxu0 %v93
    %103 = vmatprep.subr.mxu0 0.0
    %104 = vmatpush1.msra.mxu0 %v94
    %105 = vmatprep.subr.mxu0 0.0
    %106 = vmatpush1.msra.mxu0 %v95
    %107 = vmatprep.subr.mxu0 0.0
    %108 = vmatpush1.msra.mxu0 %v96
    %109 = vmatprep.subr.mxu0 0.0
    %110 = vmatpush1.msra.mxu0 0.0
    %111 = vmatprep.subr.mxu0 0.0
    %112 = vmatpush1.msra.mxu0 0.0
    %113 = vmatprep.subr.mxu0 0.0
    %114 = vmatpush1.msra.mxu0 0.0
    %115 = vmatprep.subr.mxu0 0.0
    %116 = vmatpush1.msra.mxu0 0.0
    %117 = vmatprep.subr.mxu0 0.0
    %118 = vmatpush1.msra.mxu0 0.0
    %119 = vmatprep.subr.mxu0 0.0
    %120 = vmatpush1.msra.mxu0 0.0
    %121 = vmatprep.subr.mxu0 0.0
    %122 = vmatpush1.msra.mxu0 0.0
    %123 = vmatprep.subr.mxu0 0.0
    %124 = vmatpush1.msra.mxu0 0.0
    %125 = vmatprep.subr.mxu0 0.0
    %126 = vmatpush1.msra.mxu0 0.0
    %127 = vmatprep.subr.mxu0 0.0
    %128 = vmatpush1.msra.mxu0 0.0
    %129 = vmatprep.subr.mxu0 0.0
    %130 = vmatpush1.msra.mxu0 0.0
    %131 = vmatprep.subr.mxu0 0.0
    %132 = vmatpush1.msra.mxu0 0.0
    %133 = vmatprep.subr.mxu0 0.0
    %134 = vmatpush1.msra.mxu0 0.0
    %135 = vmatprep.subr.mxu0 0.0
    %136 = vmatpush1.msra.mxu0 0.0
    %137 = vmatprep.subr.mxu0 0.0
    %138 = vmatpush1.msra.mxu0 0.0
    %139 = vmatprep.subr.mxu0 0.0
    %140 = vmatpush1.msra.mxu0 0.0
    %141 = vmatprep.subr.mxu0 0.0
    %142 = vmatpush1.msra.mxu0 0.0
    %143 = vmatprep.subr.mxu0 0.0
    %144 = vmatpush1.msra.mxu0 0.0
    %145 = vmatprep.subr.mxu0 0.0
    %146 = vmatpush1.msra.mxu0 0.0
    %147 = vmatprep.subr.mxu0 0.0
    %148 = vmatpush1.msra.mxu0 0.0
    %149 = vmatprep.subr.mxu0 0.0
    %150 = vmatpush1.msra.mxu0 0.0
    %151 = vmatprep.subr.mxu0 0.0
    %152 = vmatpush1.msra.mxu0 0.0
    %153 = vmatprep.subr.mxu0 0.0
    %154 = vmatpush1.msra.mxu0 0.0
    %155 = vmatprep.subr.mxu0 0.0
    %156 = vmatpush1.msra.mxu0 0.0
    %157 = vmatprep.subr.mxu0 0.0
    %158 = vmatpush1.msra.mxu0 0.0
    %159 = vmatprep.subr.mxu0 0.0
    %160 = vmatpush1.msra.mxu0 0.0
    %161 = vmatprep.subr.mxu0 0.0
    %162 = vmatpush1.msra.mxu0 0.0
    %163 = vmatprep.subr.mxu0 0.0
    %164 = vmatpush1.msra.mxu0 0.0
    %165 = vmatprep.mubr.f32.mxu0 0.0
    %166 = vmatmul.mubr.f32.gmra.mrb[0].mxu0 %v99
    %v167 = vpop.f32.mrb[0].mxu0
    %v168 = vadd.f32 0.0, %v167
    %v169 = vpop.f32.mrb[0].mxu0
    %170 = vdwg.mxu0
    %vm171 = vcmask 130048
    %v173 = vsel %vm171, %v89, 0
    %175 = vmatprep.subr.mxu0 0.0
    %176 = vmatpush1.msra.mxu0 %v91
    %177 = vmatprep.subr.mxu0 0.0
    %178 = vmatpush1.msra.mxu0 %v92
    %179 = vmatprep.subr.mxu0 0.0
    %180 = vmatpush1.msra.mxu0 0.0
    %181 = vmatprep.subr.mxu0 0.0
    %182 = vmatpush1.msra.mxu0 0.0
    %183 = vmatprep.subr.mxu0 0.0
    %184 = vmatpush1.msra.mxu0 0.0
    %185 = vmatprep.subr.mxu0 0.0
    %186 = vmatpush1.msra.mxu0 0.0
    %187 = vmatprep.subr.mxu0 0.0
    %188 = vmatpush1.msra.mxu0 0.0
    %189 = vmatprep.subr.mxu0 0.0
    %190 = vmatpush1.msra.mxu0 0.0
    %191 = vmatprep.subr.mxu0 0.0
    %192 = vmatpush1.msra.mxu0 0.0
    %193 = vmatprep.subr.mxu0 0.0
    %194 = vmatpush1.msra.mxu0 0.0
    %195 = vmatprep.subr.mxu0 0.0
    %196 = vmatpush1.msra.mxu0 0.0
    %197 = vmatprep.subr.mxu0 0.0
    %198 = vmatpush1.msra.mxu0 0.0
    %199 = vmatprep.subr.mxu0 0.0
    %200 = vmatpush1.msra.mxu0 0.0
    %201 = vmatprep.subr.mxu0 0.0
    %202 = vmatpush1.msra.mxu0 0.0
    %203 = vmatprep.subr.mxu0 0.0
    %204 = vmatpush1.msra.mxu0 0.0
    %205 = vmatprep.subr.mxu0 0.0
    %206 = vmatpush1.msra.mxu0 0.0
    %207 = vmatprep.subr.mxu0 0.0
    %208 = vmatpush1.msra.mxu0 0.0
    %209 = vmatprep.subr.mxu0 0.0
    %210 = vmatpush1.msra.mxu0 0.0
    %211 = vmatprep.subr.mxu0 0.0
    %212 = vmatpush1.msra.mxu0 0.0
    %213 = vmatprep.subr.mxu0 0.0
    %214 = vmatpush1.msra.mxu0 0.0
    %215 = vmatprep.subr.mxu0 0.0
    %216 = vmatpush1.msra.mxu0 0.0
    %217 = vmatprep.subr.mxu0 0.0
    %218 = vmatpush1.msra.mxu0 0.0
    %219 = vmatprep.subr.mxu0 0.0
    %220 = vmatpush1.msra.mxu0 0.0
    %221 = vmatprep.subr.mxu0 0.0
    %222 = vmatpush1.msra.mxu0 0.0
    %223 = vmatprep.subr.mxu0 0.0
    %224 = vmatpush1.msra.mxu0 0.0
    %225 = vmatprep.subr.mxu0 0.0
    %226 = vmatpush1.msra.mxu0 0.0
    %227 = vmatprep.subr.mxu0 0.0
    %228 = vmatpush1.msra.mxu0 0.0
    %229 = vmatprep.subr.mxu0 0.0
    %230 = vmatpush1.msra.mxu0 0.0
    %231 = vmatprep.subr.mxu0 0.0
    %232 = vmatpush1.msra.mxu0 0.0
    %233 = vmatprep.subr.mxu0 0.0
    %234 = vmatpush1.msra.mxu0 0.0
    %235 = vmatprep.subr.mxu0 0.0
    %236 = vmatpush1.msra.mxu0 0.0
    %237 = vmatprep.subr.mxu0 0.0
    %238 = vmatpush1.msra.mxu0 0.0
    %239 = vmatprep.mubr.f32.mxu0 0.0
    %240 = vmatmul.mubr.f32.gmra.mrb[0].mxu0 %v173
    %v241 = vpop.f32.mrb[0].mxu0
    %v242 = vadd.f32 %v168, %v241
    %v243 = vpop.f32.mrb[0].mxu0
    %244 = vdwg.mxu0
    %v245 = vld [vmem:[%s5] sm:$0x1]
    %v247 = vlaneseq
    %v248 = vshrl.u32 %v247, 7
    %v249 = vsub.s32 0, %v248
    %v250 = vrot.slane %v245, %v249
    %v252 = vadd.f32 %v242, %v250
    %v253 = vxor.u32 %v252, 2147483648
    %v254 = vmul.f32 %v253, 1.442695
    %v255 = vpow.pop %v254
    %v256 = vadd.f32 %v255, 1.0
    %v257 = vrcp.pop %v256
    %v258 = vmul.f32 1.0, %v257
    %v259 = vtanh.pop %v252
    %v260 = vld [vmem:[#allocation7] sm:$0xff]
    %v261 = vmul.f32 %v258, %v260
    %263 = vrot.lane.b32.xlu0 %v259, 64
    %v264 = vpop.permute.xlu0 %263
    %v266 = vmul.f32 %v258, %v264
    %268 = vrot.lane.b32.xlu0 %v266, 96
    %v269 = vpop.permute.xlu0 %268
    %v271 = vadd.f32 %v261, %v269
    %v272 = vtanh.pop %v271
    %274 = vrot.lane.b32.xlu0 %v272, 64
    %v275 = vpop.permute.xlu0 %274
    %v277 = vadd.f32 %v258, %v275
    %279 = vrot.lane.b32.xlu0 %v277, 64
    %v280 = vpop.permute.xlu0 %279
    %282 = vst.msk [vmem:[#allocation11] sm:$0xff] %vm97, %v280
    %283 = vst.msk [vmem:[#allocation12] sm:$0xff] %vm97, %v271
    // Predicated region
    $region46: #{lstm_cell_pallas.1} parent=1 // pred_check
      _
    $region47: #{lstm_cell_pallas.1} parent=1 // pred_check_branch
      %285 = sbr.rel (0) target = $region49
    $region48: #{lstm_cell_pallas.1} parent=1 // pred_region
      %s287 = ssub.s32 128, 128
      %288 = vsyncadd [#allocation4], %s287
      %s290 = sshll.u32 [#allocation11], 4
      %s291 = int_to_ptr.vmem [resolvable:$true] %s290
      %293 = dma.vmem_to_hbm [thread:$0]  %s291, 128, %s6, [#allocation4]
    $region49: #{lstm_cell_pallas.1} parent=1 // pred_fallthru
      _
    // Predicated region
    $region50: #{lstm_cell_pallas.1} parent=1 // pred_check
      _
    $region51: #{lstm_cell_pallas.1} parent=1 // pred_check_branch
      %295 = sbr.rel (0) target = $region53
    $region52: #{lstm_cell_pallas.1} parent=1 // pred_region
      %s297 = ssub.s32 128, 128
      %298 = vsyncadd [#allocation13], %s297
      %s300 = sshll.u32 [#allocation12], 4
      %s301 = int_to_ptr.vmem [resolvable:$true] %s300
      %303 = dma.vmem_to_hbm [thread:$0]  %s301, 128, %s7, [#allocation13]
    $region53: #{lstm_cell_pallas.1} parent=1 // pred_fallthru
      _
    // Predicated region
    $region54: #{lstm_cell_pallas.1} parent=1 // pred_check
      _
    $region55: #{lstm_cell_pallas.1} parent=1 // pred_check_branch
      %305 = sbr.rel (0) target = $region57
    $region56: #{lstm_cell_pallas.1} parent=1 // pred_region
      %306 = dma.done [#allocation4], 128
    $region57: #{lstm_cell_pallas.1} parent=1 // pred_fallthru
      _
    // Predicated region
    $region58: #{lstm_cell_pallas.1} parent=1 // pred_check
      _
    $region59: #{lstm_cell_pallas.1} parent=1 // pred_check_branch
      %308 = sbr.rel (0) target = $region61
    $region60: #{lstm_cell_pallas.1} parent=1 // pred_region
      %309 = dma.done [#allocation13], 128
    $region61: #{lstm_cell_pallas.1} parent=1 // pred_fallthru
      _
    %310 = vsyncpa [#allocation3], 1
    %311 = vsyncpa [#allocation6], 1
    %312 = vsyncpa [#allocation9], 1
    %313 = vsyncpa [#allocation4], 1
    %314 = vsyncpa [#allocation13], 1

</llo_original>
